<compile_context>
chip_gen: v7x
topology: tpu7x:2x2x1
jax: 0.10.0
libtpu: 0.0.40
codegen_flags: <defaults>
</compile_context>

<pallas_src>
import functools
import math

import jax
import jax.numpy as jnp
from jax import lax
from jax.experimental import pallas as pl
from jax.experimental.pallas import tpu as pltpu


# Scoped VMEM budget: leaves headroom inside v7x's 64 MiB/TC physical VMEM and
# is well under v5e/v6e's 128 MiB.
_VMEM_LIMIT = 48 * 1024 * 1024


# ---------------------------------------------------------------------------
# Tile-size helpers (respect the (8, 128) block constraints)
# ---------------------------------------------------------------------------
def _pick_sublane_tile(dim, target, *, name="dim"):
    """Largest multiple-of-8 tile <= target that divides dim (or the full dim)."""
    if dim <= target:
        return dim
    t = (target // 8) * 8
    while t >= 8:
        if dim % t == 0:
            return t
        t -= 8
    raise ValueError(
        f"{name}={dim}: no multiple-of-8 tile <= {target} divides it; pad the "
        f"input so {name} is a multiple of 8 (a monolithic fallback block "
        f"would blow the VMEM budget).")


def _pick_lane_tile(dim, target, *, name="dim"):
    """Lane (last-dim) tiles must be multiples of 128 or the full dim."""
    if dim <= target:
        return dim
    t = (target // 128) * 128
    while t >= 128:
        if dim % t == 0:
            return t
        t -= 128
    raise ValueError(
        f"{name}={dim}: no multiple-of-128 tile <= {target} divides it; pad "
        f"the input so {name} is a multiple of 128 (a monolithic fallback "
        f"block would blow the VMEM budget).")


# ---------------------------------------------------------------------------
# Kernel 1: tiled linear  y = x @ W + b   (W pre-transposed to (in, out))
#   Operands arrive already in the compute dtype (bf16); bias stays f32 and is
#   added to the f32 accumulator at finalize.
# ---------------------------------------------------------------------------
def _linear_kernel(x_ref, w_ref, b_ref, o_ref, acc_ref):
    ki = pl.program_id(2)

    @pl.when(ki == 0)
    def _init():
        acc_ref[...] = jnp.zeros_like(acc_ref)

    acc_ref[...] += jnp.dot(x_ref[...], w_ref[...],
                            preferred_element_type=jnp.float32)

    @pl.when(ki == pl.num_programs(2) - 1)
    def _finalize():
        o_ref[...] = (acc_ref[...] + b_ref[...]).astype(o_ref.dtype)


def pallas_linear(x, w, b, *, out_dtype=None, tm=512, tn=512, tk=512):
    """x: (M, K), w: (K, N), b: (1, N) f32 -> (M, N) in out_dtype."""
    M, K = x.shape
    K2, N = w.shape
    assert K == K2 and b.shape == (1, N)
    out_dtype = out_dtype if out_dtype is not None else x.dtype
    tm = _pick_sublane_tile(M, tm, name="M")
    tn = _pick_lane_tile(N, tn, name="N")
    tk = _pick_lane_tile(K, tk, name="K")
    grid = (M // tm, N // tn, K // tk)
    return pl.pallas_call(
        _linear_kernel,
        out_shape=jax.ShapeDtypeStruct((M, N), out_dtype),
        grid=grid,
        in_specs=[
            pl.BlockSpec((tm, tk), lambda mi, ni, ki: (mi, ki)),
            pl.BlockSpec((tk, tn), lambda mi, ni, ki: (ki, ni)),
            pl.BlockSpec((1, tn), lambda mi, ni, ki: (0, ni)),
        ],
        out_specs=pl.BlockSpec((tm, tn), lambda mi, ni, ki: (mi, ni)),
        scratch_shapes=[pltpu.VMEM((tm, tn), jnp.float32)],
        compiler_params=pltpu.CompilerParams(
            dimension_semantics=("parallel", "parallel", "arbitrary"),
            vmem_limit_bytes=_VMEM_LIMIT),
        cost_estimate=pl.CostEstimate(
            flops=int(2 * M * N * K),
            transcendentals=0,
            bytes_accessed=int(x.dtype.itemsize * M * K
                               + w.dtype.itemsize * K * N
                               + jnp.dtype(out_dtype).itemsize * M * N
                               + 4 * N)),
    )(x, w, b)


# ---------------------------------------------------------------------------
# Kernel 2: flash attention over head-group slabs in (B, S, d_model) layout
#   Each grid step sees a (tq, G*dk) / (tkv, G*dk) lane-dense slab holding G
#   heads packed along the lane dim; the per-head (block-diagonal) contraction
#   is a static unrolled loop.  KV axis is the innermost ("arbitrary") axis.
# ---------------------------------------------------------------------------
def _flash_kernel(q_ref, k_ref, v_ref, o_ref, m_ref, l_ref, acc_ref, *, G, dk):
    ki = pl.program_id(3)

    @pl.when(ki == 0)
    def _init():
        m_ref[...] = jnp.full_like(m_ref, -jnp.inf)
        l_ref[...] = jnp.zeros_like(l_ref)
        acc_ref[...] = jnp.zeros_like(acc_ref)

    # Q is already pre-scaled by 1/sqrt(d_k) (folded into the projection).
    for g in range(G):
        lo = g * dk
        qg = q_ref[0, :, lo:lo + dk]      # (tq, dk)  bf16
        kg = k_ref[0, :, lo:lo + dk]      # (tkv, dk) bf16
        vg = v_ref[0, :, lo:lo + dk]      # (tkv, dk) bf16

        # s = q @ k^T -- contract on d_k of both operands, no transpose.
        s = lax.dot_general(qg, kg, (((1,), (1,)), ((), ())),
                            preferred_element_type=jnp.float32)   # (tq, tkv)

        m_prev = m_ref[g]                                          # (tq, 1)
        m_new = jnp.maximum(m_prev, jnp.max(s, axis=-1, keepdims=True))
        alpha = jnp.exp(m_prev - m_new)
        p = jnp.exp(s - m_new)
        l_ref[g] = alpha * l_ref[g] + jnp.sum(p, axis=-1, keepdims=True)
        acc_ref[g] = alpha * acc_ref[g] + jnp.dot(
            p.astype(vg.dtype), vg, preferred_element_type=jnp.float32)
        m_ref[g] = m_new

    @pl.when(ki == pl.num_programs(3) - 1)
    def _finalize():
        # Per-head VMEM stores into the (1, tq, G*dk) out block; the HBM
        # writeback DMA of the block itself is lane-dense.
        for g in range(G):
            inv_l = pl.reciprocal(l_ref[g], approx=True)
            o_ref[0, :, g * dk:(g + 1) * dk] = (
                acc_ref[g] * inv_l).astype(o_ref.dtype)


def pallas_flash_attention(q, k, v, *, G, dk, d_out, block_offsets=(0, 0, 0),
                           tq=256, tkv=512, out_dtype=None):
    """q/k/v: (B, S, *) slab-indexed tensors -> (B, Sq, d_out).

    `block_offsets` are per-operand offsets (in head-group blocks of width
    G*dk) along the last dim, used to read Q/K/V out of one fused QKV tensor
    without any slicing/transpose at the JAX level.
    """
    B, Sq, _ = q.shape
    Sk = k.shape[1]
    Gdk = G * dk
    assert d_out % Gdk == 0
    HG = d_out // Gdk
    qo, ko, vo = block_offsets
    out_dtype = out_dtype if out_dtype is not None else q.dtype
    tq = _pick_sublane_tile(Sq, tq, name="Sq")
    tkv = _pick_sublane_tile(Sk, tkv, name="Sk")
    grid = (B, HG, Sq // tq, Sk // tkv)
    kernel = functools.partial(_flash_kernel, G=G, dk=dk)
    return pl.pallas_call(
        kernel,
        out_shape=jax.ShapeDtypeStruct((B, Sq, d_out), out_dtype),
        grid=grid,
        in_specs=[
            pl.BlockSpec((1, tq, Gdk), lambda b, hg, qi, ki, o=qo: (b, qi, hg + o)),
            pl.BlockSpec((1, tkv, Gdk), lambda b, hg, qi, ki, o=ko: (b, ki, hg + o)),
            pl.BlockSpec((1, tkv, Gdk), lambda b, hg, qi, ki, o=vo: (b, ki, hg + o)),
        ],
        out_specs=pl.BlockSpec((1, tq, Gdk), lambda b, hg, qi, ki: (b, qi, hg)),
        scratch_shapes=[
            pltpu.VMEM((G, tq, 1), jnp.float32),    # running max (per head)
            pltpu.VMEM((G, tq, 1), jnp.float32),    # running denom (per head)
            pltpu.VMEM((G, tq, dk), jnp.float32),   # output accumulator
        ],
        compiler_params=pltpu.CompilerParams(
            dimension_semantics=("parallel", "parallel", "parallel", "arbitrary"),
            vmem_limit_bytes=_VMEM_LIMIT),
        cost_estimate=pl.CostEstimate(
            flops=int(4 * B * HG * G * Sq * Sk * dk),
            transcendentals=int(B * HG * G * Sq * Sk),
            bytes_accessed=int(q.dtype.itemsize * B * d_out * (2 * Sq + 2 * Sk))),
    )(q, k, v)


# ---------------------------------------------------------------------------
# Module wrapper
# ---------------------------------------------------------------------------
class MultiHeadedAttentionPallas:
    """Eval-mode MultiHeadedAttention (dropout = identity, mask=None only)."""

    def __init__(self, h, d_model, key, *, compute_dtype=jnp.bfloat16,
                 mm_tm=512, mm_tn=512, mm_tk=512, attn_tq=256, attn_tkv=512):
        assert d_model % h == 0
        self.h = h
        self.d_k = d_model // h
        self.d_model = d_model
        self.compute_dtype = compute_dtype
        self.mm_tm, self.mm_tn, self.mm_tk = mm_tm, mm_tn, mm_tk
        self.attn_tq, self.attn_tkv = attn_tq, attn_tkv

        # Head grouping: smallest G with h % G == 0 and (G*d_k) % 128 == 0 so
        # every attention block is lane-dense; fall back to G = h (full
        # d_model slab, block == full dim) for small models.
        G = None
        for g in range(1, h + 1):
            if h % g == 0 and (g * self.d_k) % 128 == 0:
                G = g
                break
        self.G = G if G is not None else h
        self.group_width = self.G * self.d_k
        self.HG = h // self.G

        bound = 1.0 / math.sqrt(d_model)
        keys = jax.random.split(key, 8)
        # torch nn.Linear layout: W (out, in), b (out,) -- kept in f32 for the
        # reference implementation.
        self.W = [jax.random.uniform(keys[2 * i], (d_model, d_model),
                                     jnp.float32, -bound, bound)
                  for i in range(4)]
        self.b = [jax.random.uniform(keys[2 * i + 1], (d_model,),
                                     jnp.float32, -bound, bound)
                  for i in range(4)]

        cd = compute_dtype
        sm_scale = 1.0 / math.sqrt(self.d_k)
        # Pre-transposed (in, out) weights stored in bf16 at rest; the softmax
        # scale is folded into the Q projection (weights + bias).
        wq = (self.W[0].T * sm_scale).astype(cd)
        wk = self.W[1].T.astype(cd)
        wv = self.W[2].T.astype(cd)
        wo = self.W[3].T.astype(cd)
        self.Wt = [wq, wk, wv, wo]
        bq = self.b[0] * sm_scale
        self.b2 = [bq.reshape(1, d_model),
                   self.b[1].reshape(1, d_model),
                   self.b[2].reshape(1, d_model),
                   self.b[3].reshape(1, d_model)]          # biases stay f32
        # Fused QKV weight for self-attention: (d_model, 3*d_model).
        self._w_qkv = jnp.concatenate([wq, wk, wv], axis=1)
        self._b_qkv = jnp.concatenate([bq, self.b[1], self.b[2]]).reshape(
            1, 3 * d_model)

    def __call__(self, query, key, value, mask=None):
        if mask is not None:
            # TODO(synk): attention-mask path (scores masked_fill with -1e9).
            raise NotImplementedError("mask path not implemented")
        B, Sq, D = query.shape
        cd = self.compute_dtype
        dk, G, HG, Gdk = self.d_k, self.G, self.HG, self.group_width
        mm = dict(tm=self.mm_tm, tn=self.mm_tn, tk=self.mm_tk)

        if query is key and key is value:
            # Self-attention: fused Q/K/V projection, one pallas_call.
            x = query.astype(cd).reshape(B * Sq, D)
            y = pallas_linear(x, self._w_qkv, self._b_qkv, out_dtype=cd, **mm)
            y = y.reshape(B, Sq, 3 * D)
            if Gdk % 128 == 0:
                # Zero-copy: the flash BlockSpecs index the fused tensor with
                # lane-block offsets (Q at 0, K at HG, V at 2*HG).
                q3 = k3 = v3 = y
                offs = (0, HG, 2 * HG)
            else:
                # Small d_model: three contiguous last-dim slices (cheap),
                # still no head-split transpose anywhere.
                q3 = y[:, :, 0:D]
                k3 = y[:, :, D:2 * D]
                v3 = y[:, :, 2 * D:3 * D]
                offs = (0, 0, 0)
        else:
            def proj(xx, i):
                Bx, Sx, _ = xx.shape
                yy = pallas_linear(xx.astype(cd).reshape(Bx * Sx, D),
                                   self.Wt[i], self.b2[i], out_dtype=cd, **mm)
                return yy.reshape(Bx, Sx, D)
            q3, k3, v3 = proj(query, 0), proj(key, 1), proj(value, 2)
            offs = (0, 0, 0)

        # Attention output comes back already in (B, Sq, d_model) layout
        # (heads merged along the lane dim), lane-dense.
        att = pallas_flash_attention(q3, k3, v3, G=G, dk=dk, d_out=D,
                                     block_offsets=offs, tq=self.attn_tq,
                                     tkv=self.attn_tkv, out_dtype=cd)

        # Output projection: one dense matmul with K = d_model.
        return pallas_linear(att.reshape(B * Sq, D), self.Wt[3], self.b2[3],
                             out_dtype=query.dtype, **mm).reshape(B, Sq, D)


# ---------------------------------------------------------------------------
# Pure-JAX f32 reference for verification
# ---------------------------------------------------------------------------
def reference_forward(mha, query, key, value):
    def lin(x, i):
        return x @ mha.W[i].T + mha.b[i]

    B, Sq, D = query.shape

    def split(y):
        By, Sy = y.shape[0], y.shape[1]
        return y.reshape(By, Sy, mha.h, mha.d_k).transpose(0, 2, 1, 3)

    q, k, v = split(lin(query, 0)), split(lin(key, 1)), split(lin(value, 2))
    scores = jnp.einsum("bhqd,bhkd->bhqk", q, k) / math.sqrt(mha.d_k)
    p = jax.nn.softmax(scores, axis=-1)
    x = jnp.einsum("bhqk,bhkd->bhqd", p, v)
    x = x.transpose(0, 2, 1, 3).reshape(B, Sq, D)
    return lin(x, 3)


def _check(out, ref, name):
    max_abs = float(jnp.max(jnp.abs(out - ref)))
    rel = float(jnp.linalg.norm(out - ref) / jnp.linalg.norm(ref))
    # bf16 operands with f32 accumulation -> tolerance sized for bf16.
    assert jnp.allclose(out, ref, atol=3e-2, rtol=3e-2), (
        f"{name}: mismatch vs reference (max abs {max_abs:.2e}, rel {rel:.2e})")
    assert rel < 2e-2, f"{name}: relative error too high ({rel:.2e})"


if __name__ == "__main__":
    root = jax.random.PRNGKey(0)

    def run_case(name, B, S, d_model, h, case_key, **cfg):
        kq, kk, kv, kp = jax.random.split(case_key, 4)
        query = jax.random.normal(kq, (B, S, d_model), jnp.float32)
        key_in = jax.random.normal(kk, (B, S, d_model), jnp.float32)
        value = jax.random.normal(kv, (B, S, d_model), jnp.float32)
        mha = MultiHeadedAttentionPallas(h, d_model, kp, **cfg)

        # Cross-attention path (separate Q/K/V projections, slab indexing).
        out = jax.block_until_ready(mha(query, key_in, value))
        assert out.shape == (B, S, d_model)
        _check(out, reference_forward(mha, query, key_in, value), name + "/cross")

        # Self-attention path (fused QKV projection).
        out_self = jax.block_until_ready(mha(query, query, query))
        assert out_self.shape == (B, S, d_model)
        _check(out_self, reference_forward(mha, query, query, query), name + "/self")

    k1, k2 = jax.random.split(root)

    # Case 1: tiny d_k (=8) -> grouped heads (G=h) packed along the lane dim.
    # Small tiles so the demo exercises the tiled grids and the multi-step
    # online softmax (2 Q tiles, 2 KV tiles, 2 M tiles).
    run_case("dk8", B=2, S=16, d_model=32, h=4, case_key=k1,
             mm_tm=16, attn_tq=8, attn_tkv=8)

    # Case 2: 128-aligned d_k -> zero-copy fused-QKV slab indexing, 2 head
    # groups, multi-step K reduction in the linears.
    run_case("dk128", B=2, S=16, d_model=256, h=2, case_key=k2,
             mm_tn=256, mm_tk=128, attn_tq=8, attn_tkv=8)

    print("KERNEL_OK")
</pallas_src>

<mosaic_0001>
module attributes {stable_mosaic.version = 11 : i64} {
  func.func @_linear_kernel(%arg0: i32, %arg1: i32, %arg2: i32, %arg3: memref<16x32xbf16, #tpu.memory_space<vmem>>, %arg4: memref<32x32xbf16, #tpu.memory_space<vmem>>, %arg5: memref<1x32xf32, #tpu.memory_space<vmem>>, %arg6: memref<16x32xbf16, #tpu.memory_space<vmem>>, %arg7: memref<16x32xf32, #tpu.memory_space<vmem>>) attributes {dimension_semantics = [#tpu.dimension_semantics<parallel>, #tpu.dimension_semantics<parallel>, #tpu.dimension_semantics<arbitrary>], iteration_bounds = array<i64: 2, 1, 1>, scalar_prefetch = 0 : i64, scratch_operands = 1 : i64, tpu.core_type = #tpu.core_type<tc>, window_params = [{transform_indices = @transform_0, window_bounds = array<i64: 16, 32>}, {transform_indices = @transform_1, window_bounds = array<i64: 32, 32>}, {transform_indices = @transform_2, window_bounds = array<i64: 1, 32>}, {transform_indices = @transform_3, window_bounds = array<i64: 16, 32>}]} {
    %c0_i32 = arith.constant 0 : i32
    %0 = arith.cmpi eq, %arg2, %c0_i32 : i32
    %1 = arith.extui %0 : i1 to i32
    %c0_i32_0 = arith.constant 0 : i32
    %2 = arith.cmpi ne, %1, %c0_i32_0 : i32
    scf.if %2 {
      %cst_10 = arith.constant 0.000000e+00 : f32
      %12 = vector.broadcast %cst_10 : f32 to vector<16x32xf32>
      %c0_11 = arith.constant 0 : index
      %c0_12 = arith.constant 0 : index
      %13 = vector.load %arg7[%c0_11, %c0_12] : memref<16x32xf32, #tpu.memory_space<vmem>>, vector<16x32xf32>
      tpu.vector_store %arg7[%c0_11, %c0_12], %12 {strides = array<i32>} : memref<16x32xf32, #tpu.memory_space<vmem>>, vector<16x32xf32>,
    } else {
    }
    %c0 = arith.constant 0 : index
    %c0_1 = arith.constant 0 : index
    %3 = vector.load %arg7[%c0, %c0_1] : memref<16x32xf32, #tpu.memory_space<vmem>>, vector<16x32xf32>
    %c0_2 = arith.constant 0 : index
    %c0_3 = arith.constant 0 : index
    %4 = vector.load %arg3[%c0_2, %c0_3] : memref<16x32xbf16, #tpu.memory_space<vmem>>, vector<16x32xbf16>
    %c0_4 = arith.constant 0 : index
    %c0_5 = arith.constant 0 : index
    %5 = vector.load %arg4[%c0_4, %c0_5] : memref<32x32xbf16, #tpu.memory_space<vmem>>, vector<32x32xbf16>
    %cst = arith.constant dense<0.000000e+00> : vector<16x32xf32>
    %6 = tpu.matmul %4, %5, %cst {dimension_numbers = #tpu.dot_dimension_numbers<[1], [0], [0], [1], [0, 0, 1, 1], [], []>} : vector<16x32xbf16>, vector<32x32xbf16>, vector<16x32xf32> -> vector<16x32xf32>
    %7 = arith.addf %3, %6 : vector<16x32xf32>
    %c0_6 = arith.constant 0 : index
    %c0_7 = arith.constant 0 : index
    %8 = vector.load %arg7[%c0_6, %c0_7] : memref<16x32xf32, #tpu.memory_space<vmem>>, vector<16x32xf32>
    tpu.vector_store %arg7[%c0_6, %c0_7], %7 {strides = array<i32>} : memref<16x32xf32, #tpu.memory_space<vmem>>, vector<16x32xf32>,
    %c0_i32_8 = arith.constant 0 : i32
    %9 = arith.cmpi eq, %arg2, %c0_i32_8 : i32
    %10 = arith.extui %9 : i1 to i32
    %c0_i32_9 = arith.constant 0 : i32
    %11 = arith.cmpi ne, %10, %c0_i32_9 : i32
    scf.if %11 {
      %c0_10 = arith.constant 0 : index
      %c0_11 = arith.constant 0 : index
      %12 = vector.load %arg7[%c0_10, %c0_11] : memref<16x32xf32, #tpu.memory_space<vmem>>, vector<16x32xf32>
      %c0_12 = arith.constant 0 : index
      %c0_13 = arith.constant 0 : index
      %13 = vector.load %arg5[%c0_12, %c0_13] : memref<1x32xf32, #tpu.memory_space<vmem>>, vector<1x32xf32>
      %14 = vector.broadcast %13 : vector<1x32xf32> to vector<16x32xf32>
      %15 = arith.addf %12, %14 : vector<16x32xf32>
      %16 = arith.truncf %15 : vector<16x32xf32> to vector<16x32xbf16>
      %c0_14 = arith.constant 0 : index
      %c0_15 = arith.constant 0 : index
      %17 = vector.load %arg6[%c0_14, %c0_15] : memref<16x32xbf16, #tpu.memory_space<vmem>>, vector<16x32xbf16>
      tpu.vector_store %arg6[%c0_14, %c0_15], %16 {strides = array<i32>} : memref<16x32xbf16, #tpu.memory_space<vmem>>, vector<16x32xbf16>,
    } else {
    }
    return
  }
  func.func @transform_0(%arg0: i32, %arg1: i32, %arg2: i32) -> (i32, i32) {
    %c0_i32 = arith.constant 0 : i32
    return %arg0, %arg2 : i32, i32
  }
  func.func @transform_1(%arg0: i32, %arg1: i32, %arg2: i32) -> (i32, i32) {
    %c0_i32 = arith.constant 0 : i32
    return %arg2, %arg1 : i32, i32
  }
  func.func @transform_2(%arg0: i32, %arg1: i32, %arg2: i32) -> (i32, i32) {
    %c0_i32 = arith.constant 0 : i32
    %c0_i32_0 = arith.constant 0 : i32
    return %c0_i32, %arg1 : i32, i32
  }
  func.func @transform_3(%arg0: i32, %arg1: i32, %arg2: i32) -> (i32, i32) {
    %c0_i32 = arith.constant 0 : i32
    return %arg0, %arg1 : i32, i32
  }
}

</mosaic_0001>

<llo_original>
// kernel: tpu_custom_call.1
$region0: #{tpu_custom_call.1}
  #allocation0 [shape = 'u32[]', space=smem, size = 0x4, offset = 0x4, fixed_abs, tag = 'smem constant byte address 0x4 - core index']
  #allocation1 [shape = 'u32[144,128]{1,0:T(1,128)}', space=vmem, size = 0x12000, scoped, tag = 'internal scratch']
  #allocation2 [shape = 'f32[16,32]{1,0:T(8,128)}', space=vmem, size = 0x2000, scoped, tag = 'scratch operand']
  %s0 = inlined_call_operand.hbm [shape: bf16[32,32], index: 0, kind: input, shape index: {}]
  %s1 = inlined_call_operand.hbm [shape: bf16[32,32], index: 1, kind: input, shape index: {}]
  %s2 = inlined_call_operand.vmem [shape: f32[1,32], index: 2, kind: input, shape index: {}]
  %s3 = inlined_call_operand.hbm [shape: bf16[32,32], index: 3, kind: output, shape index: {}]
  %s4 = sld [smem:[#allocation0]]
  $region61: #{tpu_custom_call.1} parent=0
    _
  %s6 = ssub.s32 1, %s4
  %s7 = scalar_select 0, %s6, %s4
  $region1: #{tpu_custom_call.1} parent=0
    #allocation3 [shape = 'u8[8192]{0}', space=vmem, size = 0x2000, scoped, tag = 'input window, operand 0']
    #allocation4 [shape = 's32[2]{0}', space=sflag, size = 0x8, scoped, tag = 'scoped memory for tpu_custom_call.1']
    #allocation5 [shape = 's32[2]{0}', space=sflag, size = 0x8, scoped, tag = 'scoped memory for tpu_custom_call.1']
    #allocation6 [shape = 'u8[8192]{0}', space=vmem, size = 0x2000, scoped, tag = 'input window, operand 1, single buffered']
    #allocation7 [shape = 's32[1]{0}', space=sflag, size = 0x4, scoped, tag = 'scoped memory for tpu_custom_call.1']
    #allocation8 [shape = 'u8[8192]{0}', space=vmem, size = 0x2000, scoped, tag = 'output window, operand 0']
    %8 = vsyncpa [#allocation4], 0
    %s9 = scalar_lea.sflag [#allocation4], 1
    %10 = vsyncpa %s9, 0
    %11 = vsyncpa [#allocation7], 0
    %12 = vsyncpa [#allocation5], 0
    %s13 = scalar_lea.sflag [#allocation5], 1
    %14 = vsyncpa %s13, 0
    loop: start=0, step=1, limit=4
    $region2: #{tpu_custom_call.1} parent=1 // loop_pre_header
      _
    $region3: #{tpu_custom_call.1} parent=1 // loop_header
      %s16 = sphi 0, %s20
      %p17 = scmp.ge.s32.totalorder %s16, 4
      %s23 = sphi 0, %s42
      %s24 = sphi 0, %s38
      %s25 = sphi 0, %s34
      %s26 = sphi 0, %s23
      %s27 = sphi 0, %s24
      %s28 = sphi 0, %s25
      %s29 = sphi 0, %s26
      %s30 = sphi 0, %s27
      %s31 = sphi 0, %s28
      %s47 = sphi 0, %s49
      %s50 = sphi 0, %s47
      %s51 = sphi 0, %s50
      %s67 = sphi 0, %s51
      %s75 = sphi 0, %s77
      %s78 = sphi 0, %s75
      %s79 = sphi 0, %s78
      %s95 = sphi 0, %s79
      %s101 = sphi 0, %s103
      %s104 = sphi 0, %s101
      %s105 = sphi 0, %s104
      %s121 = sphi 0, %s105
      %s129 = sphi 0, %s131
      %s132 = sphi 0, %s129
      %s133 = sphi 0, %s132
      %s149 = sphi 0, %s133
    $region4: #{tpu_custom_call.1} parent=1 // loop_header_branch
      %19 = sbr.rel (%p17) target = $region8
    $region5: #{tpu_custom_call.1} parent=1 // loop_body
      %s21 = ssub.s32 %s16, 1
      %s22 = ssub.s32 %s16, 2
      %s32 = sadd.s32 1, %s25
      %p33 = scmp.ge.s32.totalorder %s32, 1
      %s34 = scalar_select %p33, 0, %s32
      %s35 = sadd.s32 1, %s24
      %s36 = scalar_select %p33, %s35, %s24
      %p37 = scmp.ge.s32.totalorder %s36, 1
      %s38 = scalar_select %p37, 0, %s36
      %s39 = sadd.s32 1, %s23
      %s40 = scalar_select %p37, %s39, %s23
      %p41 = scmp.ge.s32.totalorder %s40, 2
      %s42 = scalar_select %p41, 0, %s40
      %s43 = ssub.s32 %s23, %s42
      %s44 = ssub.s32 %s25, %s34
      %s45 = sor.u32 %s43, %s44
      %p46 = scmp.eq.s32.totalorder %s45, 0
      %s48 = sadd.s32 %s47, 1
      %s49 = scalar_select %p46, %s47, %s48
      %p52 = pneg %p46
      %p53 = scmp.eq.s32.totalorder %s16, 1
      %p54 = por %p52, %p53
      %p55 = scmp.ne.s32.totalorder %s47, %s50
      %p56 = scmp.eq.s32.totalorder %s16, 0
      %p57 = por %p55, %p56
      %p58 = scmp.ne.s32.totalorder %s47, %s50
      %p59 = scmp.eq.s32.totalorder %s21, 1
      %p60 = por %p58, %p59
      %p61 = scmp.ne.s32.totalorder %s50, %s51
      %p62 = scmp.eq.s32.totalorder %s21, 0
      %p63 = por %p61, %p62
      %p64 = scmp.ne.s32.totalorder %s50, %s51
      %p65 = scmp.eq.s32.totalorder %s22, 1
      %p66 = por %p64, %p65
      %p68 = scmp.ne.s32.totalorder %s51, %s67
      %p69 = scmp.eq.s32.totalorder %s22, 0
      %p70 = por %p68, %p69
      %s71 = ssub.s32 %s25, %s34
      %s72 = ssub.s32 %s24, %s38
      %s73 = sor.u32 %s71, %s72
      %p74 = scmp.eq.s32.totalorder %s73, 0
      %s76 = sadd.s32 %s75, 1
      %s77 = scalar_select %p74, %s75, %s76
      %p80 = pneg %p74
      %p81 = scmp.eq.s32.totalorder %s16, 1
      %p82 = por %p80, %p81
      %p83 = scmp.ne.s32.totalorder %s75, %s78
      %p84 = scmp.eq.s32.totalorder %s16, 0
      %p85 = por %p83, %p84
      %p86 = scmp.ne.s32.totalorder %s75, %s78
      %p87 = scmp.eq.s32.totalorder %s21, 1
      %p88 = por %p86, %p87
      %p89 = scmp.ne.s32.totalorder %s78, %s79
      %p90 = scmp.eq.s32.totalorder %s21, 0
      %p91 = por %p89, %p90
      %p92 = scmp.ne.s32.totalorder %s78, %s79
      %p93 = scmp.eq.s32.totalorder %s22, 1
      %p94 = por %p92, %p93
      %p96 = scmp.ne.s32.totalorder %s79, %s95
      %p97 = scmp.eq.s32.totalorder %s22, 0
      %p98 = por %p96, %p97
      %s99 = ssub.s32 %s24, %s38
      %p100 = scmp.eq.s32.totalorder %s99, 0
      %s102 = sadd.s32 %s101, 1
      %s103 = scalar_select %p100, %s101, %s102
      %p106 = pneg %p100
      %p107 = scmp.eq.s32.totalorder %s16, 1
      %p108 = por %p106, %p107
      %p109 = scmp.ne.s32.totalorder %s101, %s104
      %p110 = scmp.eq.s32.totalorder %s16, 0
      %p111 = por %p109, %p110
      %p112 = scmp.ne.s32.totalorder %s101, %s104
      %p113 = scmp.eq.s32.totalorder %s21, 1
      %p114 = por %p112, %p113
      %p115 = scmp.ne.s32.totalorder %s104, %s105
      %p116 = scmp.eq.s32.totalorder %s21, 0
      %p117 = por %p115, %p116
      %p118 = scmp.ne.s32.totalorder %s104, %s105
      %p119 = scmp.eq.s32.totalorder %s22, 1
      %p120 = por %p118, %p119
      %p122 = scmp.ne.s32.totalorder %s105, %s121
      %p123 = scmp.eq.s32.totalorder %s22, 0
      %p124 = por %p122, %p123
      %s125 = ssub.s32 %s23, %s42
      %s126 = ssub.s32 %s24, %s38
      %s127 = sor.u32 %s125, %s126
      %p128 = scmp.eq.s32.totalorder %s127, 0
      %s130 = sadd.s32 %s129, 1
      %s131 = scalar_select %p128, %s129, %s130
      %p134 = pneg %p128
      %p135 = scmp.eq.s32.totalorder %s16, 1
      %p136 = por %p134, %p135
      %p137 = scmp.ne.s32.totalorder %s129, %s132
      %p138 = scmp.eq.s32.totalorder %s16, 0
      %p139 = por %p137, %p138
      %p140 = scmp.ne.s32.totalorder %s129, %s132
      %p141 = scmp.eq.s32.totalorder %s21, 1
      %p142 = por %p140, %p141
      %p143 = scmp.ne.s32.totalorder %s132, %s133
      %p144 = scmp.eq.s32.totalorder %s21, 0
      %p145 = por %p143, %p144
      %p146 = scmp.ne.s32.totalorder %s132, %s133
      %p147 = scmp.eq.s32.totalorder %s22, 1
      %p148 = por %p146, %p147
      %p150 = scmp.ne.s32.totalorder %s133, %s149
      %p151 = scmp.eq.s32.totalorder %s22, 0
      %p152 = por %p150, %p151
      %p153 = scmp.le.s32.totalorder 1, %s16
      %p154 = scmp.lt.s32.totalorder %s16, 3
      %p155 = pnand %p153, %p154
      %p156 = pneg %p155
      // Predicated region
      $region9: #{tpu_custom_call.1} parent=5 // pred_check
        _
      $region10: #{tpu_custom_call.1} parent=5 // pred_check_branch
        %158 = sbr.rel (%p155) target = $region12
      $region11: #{tpu_custom_call.1} parent=5 // pred_region
        %s159 = ssub.s32 %s16, 1
        // Predicated region
        $region13: #{tpu_custom_call.1} parent=11 // pred_check
          %p160 = pneg %p91
        $region14: #{tpu_custom_call.1} parent=11 // pred_check_branch
          %162 = sbr.rel (%p160) target = $region16
        $region15: #{tpu_custom_call.1} parent=11 // pred_region
          %s163 = smul.u32 4, %s28
          %s165 = ssub.s32 256, 256
          %166 = vsyncadd [#allocation7], %s165
          %s167 = sadd.s32 %s27, %s163
          %s168 = smul.addr %s167, 64
          %s169 = scalar_lea.hbm %s1, %s168
          %s170 = sshll.u32 [#allocation6], 4
          %s171 = int_to_ptr.vmem [resolvable:$true] %s170
          %176 = dma.hbm_to_vmem [thread:$0]  %s169, 256, %s171, [#allocation7], 64, 64, 4
        $region16: #{tpu_custom_call.1} parent=11 // pred_fallthru
          _
        // Predicated region
        $region17: #{tpu_custom_call.1} parent=11 // pred_check
          %p177 = pneg %p117
        $region18: #{tpu_custom_call.1} parent=11 // pred_check_branch
          %179 = sbr.rel (%p177) target = $region20
        $region19: #{tpu_custom_call.1} parent=11 // pred_region
          %p180 = scmp.lt.s32.totalorder %s27, 0
          %s181 = scalar_select %p180, %s27, 0
          %s182 = scalar_lea.vmem %s2, %s181
        $region20: #{tpu_custom_call.1} parent=11 // pred_fallthru
          _
      $region12: #{tpu_custom_call.1} parent=5 // pred_fallthru
        _
      %p183 = scmp.lt.s32.totalorder %s16, 2
      // Predicated region
      $region21: #{tpu_custom_call.1} parent=5 // pred_check
        %p184 = pneg %p183
      $region22: #{tpu_custom_call.1} parent=5 // pred_check_branch
        %186 = sbr.rel (%p184) target = $region24
      $region23: #{tpu_custom_call.1} parent=5 // pred_region
        // Predicated region
        $region25: #{tpu_custom_call.1} parent=23 // pred_check
          %p187 = pneg %p57
        $region26: #{tpu_custom_call.1} parent=23 // pred_check_branch
          %189 = sbr.rel (%p187) target = $region28
        $region27: #{tpu_custom_call.1} parent=23 // pred_region
          %s190 = sand.u32 %s47, 1
          %s191 = scalar_lea.sflag [#allocation4], %s190
          %s192 = sand.u32 %s47, 1
          %s193 = smul.addr %s192, 8
          %s194 = scalar_lea.vmem [#allocation3], %s193
          %s195 = smul.u32 2, %s23
          %s197 = ssub.s32 128, 128
          %198 = vsyncadd %s191, %s197
          %s199 = sadd.s32 %s25, %s195
          %s200 = smul.addr %s199, 64
          %s201 = scalar_lea.hbm %s0, %s200
          %s202 = sshll.u32 %s194, 4
          %s203 = int_to_ptr.vmem [resolvable:$true] %s202
          %208 = dma.hbm_to_vmem [thread:$0]  %s201, 128, %s203, %s191, 64, 64, 4
        $region28: #{tpu_custom_call.1} parent=23 // pred_fallthru
          _
      $region24: #{tpu_custom_call.1} parent=5 // pred_fallthru
        _
      %p209 = scmp.le.s32.totalorder 1, %s16
      %p210 = scmp.lt.s32.totalorder %s16, 3
      %p211 = pnand %p209, %p210
      %p212 = pneg %p211
      // Predicated region
      $region29: #{tpu_custom_call.1} parent=5 // pred_check
        _
      $region30: #{tpu_custom_call.1} parent=5 // pred_check_branch
        %214 = sbr.rel (%p211) target = $region32
      $region31: #{tpu_custom_call.1} parent=5 // pred_region
        %s215 = ssub.s32 %s16, 1
        %s216 = sand.u32 %s50, 1
        %s217 = scalar_lea.sflag [#allocation4], %s216
        %s218 = sand.u32 %s50, 1
        %s219 = smul.addr %s218, 8
        %s220 = scalar_lea.vmem [#allocation3], %s219
        // Predicated region
        $region33: #{tpu_custom_call.1} parent=31 // pred_check
          %p221 = pneg %p63
        $region34: #{tpu_custom_call.1} parent=31 // pred_check_branch
          %223 = sbr.rel (%p221) target = $region36
        $region35: #{tpu_custom_call.1} parent=31 // pred_region
          %224 = dma.done %s217, 128
        $region36: #{tpu_custom_call.1} parent=31 // pred_fallthru
          _
        // Predicated region
        $region37: #{tpu_custom_call.1} parent=31 // pred_check
          %p225 = pneg %p91
        $region38: #{tpu_custom_call.1} parent=31 // pred_check_branch
          %227 = sbr.rel (%p225) target = $region40
        $region39: #{tpu_custom_call.1} parent=31 // pred_region
          %228 = dma.done [#allocation7], 256
        $region40: #{tpu_custom_call.1} parent=31 // pred_fallthru
          _
        %s229 = sand.u32 %s50, 1
        %s230 = scalar_lea.sflag [#allocation4], %s229
        %s231 = sand.u32 %s50, 1
        %s232 = smul.addr %s231, 8
        %s233 = scalar_lea.vmem [#allocation3], %s232
        %p234 = pneg %p63
        %p235 = pneg %p60
        %p236 = pneg %p91
        %p237 = pneg %p88
        %p238 = scmp.lt.s32.totalorder %s27, 0
        %s239 = scalar_select %p238, %s27, 0
        %s240 = scalar_lea.vmem %s2, %s239
        %p241 = pneg %p117
        %p242 = pneg %p114
        %p243 = pneg %p145
        %p244 = pneg %p142
        %s245 = sand.u32 %s132, 1
        %s246 = scalar_lea.sflag [#allocation5], %s245
        %s247 = sand.u32 %s132, 1
        %s248 = smul.addr %s247, 8
        %s249 = scalar_lea.vmem [#allocation8], %s248
        %s250 = smul.u32 2, %s26
        %s251 = smul.u32 4, %s28
        %p252 = scmp.lt.s32.totalorder %s27, 0
        %s253 = scalar_select %p252, %s27, 0
        %s254 = scalar_lea.vmem %s2, %s253
        %s255 = smul.u32 2, %s26
        %p257 = scmp.eq.s32.totalorder %s28, 0
        // Predicated region
        $region41: #{tpu_custom_call.1} parent=31 // pred_check
          %p258 = pneg %p257
        $region42: #{tpu_custom_call.1} parent=31 // pred_check_branch
          %260 = sbr.rel (%p258) target = $region44
        $region43: #{tpu_custom_call.1} parent=31 // pred_region
          %vm261 = vcmask 261120
          %262 = vst.msk [vmem:[#allocation2] sm:$0xff] %vm261, 0.0
          %263 = vst.msk [vmem:[#allocation2 + $0x8] sm:$0xff] %vm261, 0.0
        $region44: #{tpu_custom_call.1} parent=31 // pred_fallthru
          _
        %v264 = vld [vmem:[#allocation2] sm:$0xff]
        %v265 = vld [vmem:[#allocation2 + $0x8] sm:$0xff]
        %v266 = vld [vmem:[%s220] sm:$0xf]
        %v267 = vld [vmem:[%s220 + $0x4] sm:$0xf]
        %v268 = vld [vmem:[#allocation6] sm:$0xf]
        %v269 = vld [vmem:[#allocation6 + $0x4] sm:$0xf]
        %v270 = vld [vmem:[#allocation6 + $0x8] sm:$0xf]
        %v271 = vld [vmem:[#allocation6 + $0xc] sm:$0xf]
        %v274 = vunpack.c.l.b16 %v266
        %v275 = vunpack.c.l.b16 %v267
        %v276 = vpack.c.b16 %v275, %v274
        %v281 = vunpack.c.l.b16 %v268
        %v282 = vunpack.c.l.b16 %v269
        %v283 = vunpack.c.l.b16 %v270
        %v284 = vunpack.c.l.b16 %v271
        %v285 = vpack.c.b16 %v282, %v281
        %v286 = vpack.c.b16 %v284, %v283
        %vm289 = vcmask 261120
        %v291 = vsel %vm289, %v276, 0
        %293 = vmatprep.subr.bf16.mxu0 0
        %294 = vmatpush1.bf16.msra.mxu0 %v285
        %295 = vmatprep.subr.bf16.mxu0 0
        %296 = vmatpush1.bf16.msra.mxu0 %v286
        %297 = vmatprep.subr.bf16.mxu0 0
        %298 = vmatpush1.bf16.msra.mxu0 0
        %299 = vmatprep.subr.bf16.mxu0 0
        %300 = vmatpush1.bf16.msra.mxu0 0
        %301 = vmatprep.subr.bf16.mxu0 0
        %302 = vmatpush1.bf16.msra.mxu0 0
        %303 = vmatprep.subr.bf16.mxu0 0
        %304 = vmatpush1.bf16.msra.mxu0 0
        %305 = vmatprep.subr.bf16.mxu0 0
        %306 = vmatpush1.bf16.msra.mxu0 0
        %307 = vmatprep.subr.bf16.mxu0 0
        %308 = vmatpush1.bf16.msra.mxu0 0
        %309 = vmatprep.subr.bf16.mxu0 0
        %310 = vmatpush1.bf16.msra.mxu0 0
        %311 = vmatprep.subr.bf16.mxu0 0
        %312 = vmatpush1.bf16.msra.mxu0 0
        %313 = vmatprep.subr.bf16.mxu0 0
        %314 = vmatpush1.bf16.msra.mxu0 0
        %315 = vmatprep.subr.bf16.mxu0 0
        %316 = vmatpush1.bf16.msra.mxu0 0
        %317 = vmatprep.subr.bf16.mxu0 0
        %318 = vmatpush1.bf16.msra.mxu0 0
        %319 = vmatprep.subr.bf16.mxu0 0
        %320 = vmatpush1.bf16.msra.mxu0 0
        %321 = vmatprep.subr.bf16.mxu0 0
        %322 = vmatpush1.bf16.msra.mxu0 0
        %323 = vmatprep.subr.bf16.mxu0 0
        %324 = vmatpush1.bf16.msra.mxu0 0
        %325 = vmatprep.mubr.bf16.mxu0 0
        %326 = vmatmul.mubr.bf16.gmra.mrb[0].mxu0 %v291
        %v327 = vpop.f32.mrb[0].mxu0
        %v328 = vadd.f32 0.0, %v327
        %v329 = vpop.f32.mrb[0].mxu0
        %v330 = vpop.f32.mrb[0].mxu0
        %v331 = vadd.f32 0.0, %v330
        %v332 = vpop.f32.mrb[0].mxu0
        %333 = vdwg.mxu0
        %v334 = vadd.f32 %v264, %v328
        %v335 = vadd.f32 %v265, %v331
        %336 = vst.msk [vmem:[#allocation2] sm:$0xff] %vm289, %v334
        %337 = vst.msk [vmem:[#allocation2 + $0x8] sm:$0xff] %vm289, %v335
        // Predicated region
        $region45: #{tpu_custom_call.1} parent=31 // pred_check
          %p338 = pneg %p257
        $region46: #{tpu_custom_call.1} parent=31 // pred_check_branch
          %340 = sbr.rel (%p338) target = $region48
        $region47: #{tpu_custom_call.1} parent=31 // pred_region
          %v341 = vld [vmem:[#allocation2] sm:$0xff]
          %v342 = vld [vmem:[#allocation2 + $0x8] sm:$0xff]
          %v343 = vld [vmem:[%s254] sm:$0x1]
          %v345 = vlaneseq
          %v346 = vshrl.u32 %v345, 7
          %v347 = vsub.s32 0, %v346
          %v348 = vrot.slane %v343, %v347
          %v350 = vadd.f32 %v341, %v348
          %v351 = vadd.f32 %v342, %v348
          %v352 = vpack.c.bf16 %v351, %v350
          %v354 = vunpack.c.l.b16 %v352
          %v355 = vunpack.c.h.b16 %v352
          %v356 = vpack.c.b16 %v354, %v354
          %v357 = vpack.c.b16 %v355, %v355
          %vm360 = vcmask 257024
          %361 = vst.msk [vmem:[%s249] sm:$0xf] %vm360, %v356
          %362 = vst.msk [vmem:[%s249 + $0x4] sm:$0xf] %vm360, %v357
        $region48: #{tpu_custom_call.1} parent=31 // pred_fallthru
          _
        %s363 = sand.u32 %s132, 1
        %s364 = scalar_lea.sflag [#allocation5], %s363
        %s365 = sand.u32 %s132, 1
        %s366 = smul.addr %s365, 8
        %s367 = scalar_lea.vmem [#allocation8], %s366
        // Predicated region
        $region49: #{tpu_custom_call.1} parent=31 // pred_check
          %p368 = pneg %p142
        $region50: #{tpu_custom_call.1} parent=31 // pred_check_branch
          %370 = sbr.rel (%p368) target = $region52
        $region51: #{tpu_custom_call.1} parent=31 // pred_region
          %s371 = smul.u32 2, %s26
          %s373 = ssub.s32 128, 128
          %374 = vsyncadd %s364, %s373
          %s375 = sadd.s32 %s27, %s371
          %s376 = smul.addr %s375, 64
          %s377 = scalar_lea.hbm %s3, %s376
          %s378 = sshll.u32 %s367, 4
          %s379 = int_to_ptr.vmem [resolvable:$true] %s378
          %384 = dma.vmem_to_hbm [thread:$0]  %s379, 128, %s377, %s364, 64, 64, 4
        $region52: #{tpu_custom_call.1} parent=31 // pred_fallthru
          _
      $region32: #{tpu_custom_call.1} parent=5 // pred_fallthru
        _
      %p385 = scmp.le.s32.totalorder 2, %s16
      // Predicated region
      $region53: #{tpu_custom_call.1} parent=5 // pred_check
        %p386 = pneg %p385
      $region54: #{tpu_custom_call.1} parent=5 // pred_check_branch
        %388 = sbr.rel (%p386) target = $region56
      $region55: #{tpu_custom_call.1} parent=5 // pred_region
        %s389 = ssub.s32 %s16, 2
        // Predicated region
        $region57: #{tpu_custom_call.1} parent=55 // pred_check
          %p390 = pneg %p148
        $region58: #{tpu_custom_call.1} parent=55 // pred_check_branch
          %392 = sbr.rel (%p390) target = $region60
        $region59: #{tpu_custom_call.1} parent=55 // pred_region
          %s393 = sand.u32 %s133, 1
          %s394 = scalar_lea.sflag [#allocation5], %s393
          %s395 = sand.u32 %s133, 1
          %s396 = smul.addr %s395, 8
          %s397 = scalar_lea.vmem [#allocation8], %s396
          %398 = dma.done %s394, 128
        $region60: #{tpu_custom_call.1} parent=55 // pred_fallthru
          _
      $region56: #{tpu_custom_call.1} parent=5 // pred_fallthru
        _
    $region6: #{tpu_custom_call.1} parent=1 // loop_footer
      %s20 = sadd.s32 1, %s16
    $region7: #{tpu_custom_call.1} parent=1 // loop_footer_branch
      %15 = sbr.rel target = $region3
    $region8: #{tpu_custom_call.1} parent=1 // loop_exit
      _
    %399 = vsyncpa [#allocation4], 1
    %s400 = scalar_lea.sflag [#allocation4], 1
    %401 = vsyncpa %s400, 1
    %402 = vsyncpa [#allocation7], 1
    %403 = vsyncpa [#allocation5], 1
    %s404 = scalar_lea.sflag [#allocation5], 1
    %405 = vsyncpa %s404, 1

</llo_original>
